<compile_context>
chip_gen: v7x
topology: tpu7x:2x2x1
jax: 0.10.0
libtpu: 0.0.40
codegen_flags: <defaults>
</compile_context>

<pallas_src>
import jax
import jax.numpy as jnp
from jax.experimental import pallas as pl
from jax.experimental.pallas import tpu as pltpu

_LANES = 128
_SUBLANES = 8
_WIDE_COLS = 512                 # 4 vregs wide -> unmasked vst, lane-dense output
_DEFAULT_MAX_BLOCK_ROWS = 2048   # 2048 x 512 f32 = 4 MiB per block buffer


def _round_up(x, m):
    return ((x + m - 1) // m) * m


def _affine_kernel(ab_ref, x_ref, o_ref):
    # ab_ref: SMEM (2,) float32 -> [a, b]
    # x_ref / o_ref: VMEM (tm, cols) lane-dense tiles
    a = ab_ref[0]
    b = ab_ref[1]
    o_ref[...] = a * x_ref[...].astype(jnp.float32) + b


def linear_forward(a, b, x, *, max_block_rows=_DEFAULT_MAX_BLOCK_ROWS):
    """Elementwise y = a * x + b (matches the PyTorch module's forward)."""
    orig_shape = x.shape
    n = x.size

    # Lane-dense layout: last dim a multiple of 128, row count a multiple of 8,
    # and block rows chosen so every grid step is a full, unmasked tile.
    cols = _WIDE_COLS if n >= _SUBLANES * _WIDE_COLS else _LANES
    rows_needed = pl.cdiv(n, cols)
    tm = _round_up(min(max_block_rows, _round_up(rows_needed, _SUBLANES)), _SUBLANES)
    rows = _round_up(rows_needed, tm)
    grid_m = rows // tm
    padded = rows * cols

    xf = x.reshape(-1)
    if padded != n:
        xf = jnp.pad(xf, (0, padded - n))
    x2 = xf.reshape(rows, cols)

    ab = jnp.stack([jnp.asarray(a), jnp.asarray(b)]).astype(jnp.float32)

    out = pl.pallas_call(
        _affine_kernel,
        out_shape=jax.ShapeDtypeStruct((rows, cols), jnp.float32),
        grid_spec=pltpu.PrefetchScalarGridSpec(
            num_scalar_prefetch=0,
            grid=(grid_m,),
            in_specs=[
                pl.BlockSpec(memory_space=pltpu.MemorySpace.SMEM),  # [a, b] scalars
                pl.BlockSpec((tm, cols), lambda i: (i, 0)),
            ],
            out_specs=pl.BlockSpec((tm, cols), lambda i: (i, 0)),
        ),
        compiler_params=pltpu.CompilerParams(
            # Shard the grid across TensorCores (free ~2x on v7x, no-op on v5e/v6e).
            dimension_semantics=("parallel",),
            # Explicit budget: 4 double-buffered 4 MiB tiles = 16 MiB resident,
            # safe on v5e/v6e (128 MiB) and v7x (64 MiB physical).
            vmem_limit_bytes=32 * 1024 * 1024,
        ),
    )(ab, x2)

    return out.reshape(-1)[:n].reshape(orig_shape)


if __name__ == "__main__":
    # Reproduce the reference data pipeline:
    # x_origin = linspace(100, 300, 200); x = (x - mean) / std (torch.std unbiased).
    x_origin = jnp.linspace(100.0, 300.0, 200, dtype=jnp.float32)
    mean = jnp.mean(x_origin)
    std = jnp.std(x_origin, ddof=1)
    x = (x_origin - mean) / std

    # Parameters as in Linear.__init__: zero-initialized scalars.
    _ = jax.random.PRNGKey(0)  # kept for protocol; params are deterministic zeros
    a = jnp.zeros((), dtype=jnp.float32)
    b = jnp.zeros((), dtype=jnp.float32)

    y_pred = jax.block_until_ready(linear_forward(a, b, x))
    assert y_pred.shape == x.shape
    assert jnp.allclose(y_pred, a * x + b, atol=1e-6)

    # Nonzero parameters to exercise the kernel math.
    a2 = jnp.float32(1.5)
    b2 = jnp.float32(-0.25)
    y2 = jax.block_until_ready(linear_forward(a2, b2, x))
    assert jnp.allclose(y2, a2 * x + b2, atol=1e-5)

    # Larger random input with a deliberately small block to exercise the 1-D
    # grid (multiple pipelined tiles + padded tail slice-back).
    key = jax.random.PRNGKey(0)
    x_big = jax.random.normal(key, (5000,), dtype=jnp.float32)
    y_big = jax.block_until_ready(linear_forward(a2, b2, x_big, max_block_rows=8))
    assert y_big.shape == x_big.shape
    assert jnp.allclose(y_big, a2 * x_big + b2, atol=1e-5)

    print("KERNEL_OK")
</pallas_src>

<mosaic_0001>
module attributes {stable_mosaic.version = 11 : i64} {
  func.func @_affine_kernel(%arg0: i32, %arg1: memref<2xf32, #tpu.memory_space<smem>>, %arg2: memref<8x128xf32, #tpu.memory_space<vmem>>, %arg3: memref<8x128xf32, #tpu.memory_space<vmem>>) attributes {dimension_semantics = [#tpu.dimension_semantics<parallel>], iteration_bounds = array<i64: 1>, scalar_prefetch = 0 : i64, scratch_operands = 0 : i64, tpu.core_type = #tpu.core_type<tc>, window_params = [{transform_indices = @transform_0, window_bounds = array<i64: 2>}, {transform_indices = @transform_1, window_bounds = array<i64: 8, 128>}, {transform_indices = @transform_2, window_bounds = array<i64: 8, 128>}]} {
    %c0 = arith.constant 0 : index
    %0 = memref.load %arg1[%c0] : memref<2xf32, #tpu.memory_space<smem>>
    %c1 = arith.constant 1 : index
    %1 = memref.load %arg1[%c1] : memref<2xf32, #tpu.memory_space<smem>>
    %c0_0 = arith.constant 0 : index
    %c0_1 = arith.constant 0 : index
    %2 = vector.load %arg2[%c0_0, %c0_1] : memref<8x128xf32, #tpu.memory_space<vmem>>, vector<8x128xf32>
    %3 = vector.broadcast %0 : f32 to vector<8x128xf32>
    %4 = arith.mulf %3, %2 : vector<8x128xf32>
    %5 = vector.broadcast %1 : f32 to vector<8x128xf32>
    %6 = arith.addf %4, %5 : vector<8x128xf32>
    %c0_2 = arith.constant 0 : index
    %c0_3 = arith.constant 0 : index
    %7 = vector.load %arg3[%c0_2, %c0_3] : memref<8x128xf32, #tpu.memory_space<vmem>>, vector<8x128xf32>
    tpu.vector_store %arg3[%c0_2, %c0_3], %6 {strides = array<i32>} : memref<8x128xf32, #tpu.memory_space<vmem>>, vector<8x128xf32>,
    return
  }
  func.func @transform_0(%arg0: i32) -> i32 {
    %c0_i32 = arith.constant 0 : i32
    %c0_i32_0 = arith.constant 0 : i32
    return %c0_i32 : i32
  }
  func.func @transform_1(%arg0: i32) -> (i32, i32) {
    %c0_i32 = arith.constant 0 : i32
    %c0_i32_0 = arith.constant 0 : i32
    return %arg0, %c0_i32 : i32, i32
  }
  func.func @transform_2(%arg0: i32) -> (i32, i32) {
    %c0_i32 = arith.constant 0 : i32
    %c0_i32_0 = arith.constant 0 : i32
    return %arg0, %c0_i32 : i32, i32
  }
}

</mosaic_0001>

<llo_original>
// kernel: tpu_custom_call.1
$region0: #{tpu_custom_call.1}
  #allocation0 [shape = 'u32[]', space=smem, size = 0x4, offset = 0x4, fixed_abs, tag = 'smem constant byte address 0x4 - core index']
  #allocation1 [shape = 'u32[144,128]{1,0:T(1,128)}', space=vmem, size = 0x12000, scoped, tag = 'internal scratch']
  %s0 = inlined_call_operand.hbm [shape: f32[2], index: 0, kind: input, shape index: {}]
  %s1 = inlined_call_operand.hbm [shape: f32[8,128], index: 1, kind: input, shape index: {}]
  %s2 = inlined_call_operand.hbm [shape: f32[8,128], index: 2, kind: output, shape index: {}]
  %s3 = sld [smem:[#allocation0]]
  $region26: #{tpu_custom_call.1} parent=0
    _
  %s5 = ssub.s32 1, %s3
  %s6 = scalar_select 0, %s5, %s3
  $region1: #{tpu_custom_call.1} parent=0
    #allocation2 [shape = 'u8[512]{0}', space=smem, size = 0x200, scoped, tag = 'input window, operand 0, single buffered']
    #allocation3 [shape = 's32[1]{0}', space=sflag, size = 0x4, scoped, tag = 'scoped memory for tpu_custom_call.1']
    #allocation4 [shape = 's32[1]{0}', space=sflag, size = 0x4, scoped, tag = 'scoped memory for tpu_custom_call.1']
    #allocation5 [shape = 's32[1]{0}', space=sflag, size = 0x4, scoped, tag = 'scoped memory for tpu_custom_call.1']
    #allocation6 [shape = 'u8[4096]{0}', space=vmem, size = 0x1000, scoped, tag = 'input window, operand 1, single buffered']
    #allocation7 [shape = 'u8[4096]{0}', space=vmem, size = 0x1000, scoped, tag = 'output window, operand 0, single buffered']
    %7 = vsyncpa [#allocation5], 0
    %8 = vsyncpa [#allocation3], 0
    %9 = vsyncpa [#allocation4], 0
    // Predicated region
    $region2: #{tpu_custom_call.1} parent=1 // pred_check
      _
    $region3: #{tpu_custom_call.1} parent=1 // pred_check_branch
      %11 = sbr.rel (0) target = $region5
    $region4: #{tpu_custom_call.1} parent=1 // pred_region
      %s13 = ssub.s32 16, 16
      %14 = vsyncadd [#allocation5], %s13
      %17 = dma.hbm_to_smem %s0, 16, [#allocation2], [#allocation5]
    $region5: #{tpu_custom_call.1} parent=1 // pred_fallthru
      _
    // Predicated region
    $region6: #{tpu_custom_call.1} parent=1 // pred_check
      _
    $region7: #{tpu_custom_call.1} parent=1 // pred_check_branch
      %19 = sbr.rel (0) target = $region9
    $region8: #{tpu_custom_call.1} parent=1 // pred_region
      %s21 = ssub.s32 128, 128
      %22 = vsyncadd [#allocation3], %s21
      %s24 = sshll.u32 [#allocation6], 4
      %s25 = int_to_ptr.vmem [resolvable:$true] %s24
      %27 = dma.hbm_to_vmem [thread:$0]  %s1, 128, %s25, [#allocation3]
    $region9: #{tpu_custom_call.1} parent=1 // pred_fallthru
      _
    // Predicated region
    $region10: #{tpu_custom_call.1} parent=1 // pred_check
      _
    $region11: #{tpu_custom_call.1} parent=1 // pred_check_branch
      %29 = sbr.rel (0) target = $region13
    $region12: #{tpu_custom_call.1} parent=1 // pred_region
      %30 = dma.done [#allocation5], 16
    $region13: #{tpu_custom_call.1} parent=1 // pred_fallthru
      _
    // Predicated region
    $region14: #{tpu_custom_call.1} parent=1 // pred_check
      _
    $region15: #{tpu_custom_call.1} parent=1 // pred_check_branch
      %32 = sbr.rel (0) target = $region17
    $region16: #{tpu_custom_call.1} parent=1 // pred_region
      %33 = dma.done [#allocation3], 128
    $region17: #{tpu_custom_call.1} parent=1 // pred_fallthru
      _
    %34 = sfence
    %s35 = sld [smem:[#allocation2]]
    %s36 = sld [smem:[#allocation2 + $0x1]]
    %v37 = vld [vmem:[#allocation6] sm:$0xff]
    %v38 = vstv %s35
    %v39 = vmul.f32 %v38, %v37
    %v40 = vstv %s36
    %v41 = vadd.f32 %v39, %v40
    %42 = vst [vmem:[#allocation7] sm:$0xff] %v41
    // Predicated region
    $region18: #{tpu_custom_call.1} parent=1 // pred_check
      _
    $region19: #{tpu_custom_call.1} parent=1 // pred_check_branch
      %44 = sbr.rel (0) target = $region21
    $region20: #{tpu_custom_call.1} parent=1 // pred_region
      %s46 = ssub.s32 128, 128
      %47 = vsyncadd [#allocation4], %s46
      %s49 = sshll.u32 [#allocation7], 4
      %s50 = int_to_ptr.vmem [resolvable:$true] %s49
      %52 = dma.vmem_to_hbm [thread:$0]  %s50, 128, %s2, [#allocation4]
    $region21: #{tpu_custom_call.1} parent=1 // pred_fallthru
      _
    // Predicated region
    $region22: #{tpu_custom_call.1} parent=1 // pred_check
      _
    $region23: #{tpu_custom_call.1} parent=1 // pred_check_branch
      %54 = sbr.rel (0) target = $region25
    $region24: #{tpu_custom_call.1} parent=1 // pred_region
      %55 = dma.done [#allocation4], 128
    $region25: #{tpu_custom_call.1} parent=1 // pred_fallthru
      _
    %56 = vsyncpa [#allocation3], 1
    %57 = vsyncpa [#allocation4], 1
    %58 = vsyncpa [#allocation5], 1

</llo_original>
